<compile_context>
chip_gen: v7x
topology: tpu7x:2x2x1
jax: 0.10.0
libtpu: 0.0.40
codegen_flags: <defaults>
</compile_context>

<pallas_src>
import functools

import jax
import jax.numpy as jnp
from jax.experimental import pallas as pl
from jax.experimental.pallas import tpu as pltpu


def _round_up(v, m):
    return (v + m - 1) // m * m


def _vmem_capacity_bytes():
    """Physical per-core VMEM; conservative 64 MiB (v7x) fallback."""
    try:
        return int(pltpu.get_tpu_info().vmem_capacity_bytes)
    except Exception:
        return 64 * 1024 * 1024


def _rbf_kernel(xa_ref, w_ref, o_ref, *, precision):
    """One (batch, feature) tile: o = exp(min(X_aug @ W_aug, 0)).

    xa_ref: (tn, Dp)  augmented inputs  [x, ||x||^2, 1, zero-pad]
    w_ref:  (Dp, tm)  augmented weights [2*s*c ; -s ; -s*||c||^2 ; zero-pad]
    o_ref:  (tn, tm)  output tile

    X_aug @ W_aug == -||x - c||^2 * exp(-2*log_sigma)  (the gaussian exponent),
    so the epilogue is a single clamp (VPU) + exp (EUP).
    """
    s = jnp.dot(xa_ref[...], w_ref[...],
                preferred_element_type=jnp.float32,
                precision=precision)
    o_ref[...] = jnp.exp(jnp.minimum(s, 0.0)).astype(o_ref.dtype)


def rbf_forward(x, centres, log_sigmas, *,
                block_n=None, block_m=None,
                out_dtype=jnp.float32,
                matmul_dtype=None,
                precision=jax.lax.Precision.HIGHEST):
    """Pallas RBF forward (gaussian basis).

    x: (N, D), centres: (M, D), log_sigmas: (M,)  ->  (N, M) out_dtype
    """
    n, d = x.shape
    m, d_c = centres.shape
    assert d == d_c

    f32 = jnp.float32
    x = x.astype(f32)
    centres = centres.astype(f32)
    log_sigmas = log_sigmas.astype(f32)

    # ---- per-generation sizing ---------------------------------------------
    capacity = _vmem_capacity_bytes()
    # ~48 MiB on 64 MiB parts (v7x), ~96 MiB on 128 MiB parts (v5e/v6e).
    vmem_limit = max(32 * 1024 * 1024,
                     min((capacity * 3) // 4, 100 * 1024 * 1024))
    tile_budget = (vmem_limit * 3) // 4     # headroom for compiler temporaries

    if block_n is None:
        block_n = 1024 if capacity >= 96 * 1024 * 1024 else 512

    # ---- padded sizes --------------------------------------------------------
    dp = _round_up(d + 2, 8)      # augmented contraction dim, sublane aligned
    mp = _round_up(m, 128)        # lane-dense output features

    # Batch tile: balance across tiles so the last one is never mostly padding.
    n_tiles = max(1, pl.cdiv(n, block_n))
    tn = min(_round_up(pl.cdiv(n, n_tiles), 8), _round_up(n, 8))
    n_tiles = pl.cdiv(n, tn)
    n_pad = n_tiles * tn

    # Feature tile: as large as the double-buffered f32 VMEM budget allows.
    if block_m is None:
        tm_cap = (tile_budget // 8 - tn * dp) // (dp + tn)
        tm_cap = max(128, (tm_cap // 128) * 128)
    else:
        tm_cap = max(128, _round_up(block_m, 128))
    m_tiles = pl.cdiv(mp, tm_cap)
    tm = _round_up(pl.cdiv(mp, m_tiles), 128)
    mp_pad = m_tiles * tm

    # ---- hoisted, grid-invariant wrapper math --------------------------------
    inv_sigma_sq = jnp.exp(-2.0 * log_sigmas)                      # (M,)
    c2 = jnp.sum(centres * centres, axis=-1)                       # (M,)

    x2 = jnp.sum(x * x, axis=-1, keepdims=True)                    # (N, 1)
    xa_parts = [x, x2, jnp.ones((n, 1), f32)]
    if dp > d + 2:
        xa_parts.append(jnp.zeros((n, dp - d - 2), f32))
    x_aug = jnp.concatenate(xa_parts, axis=-1)                     # (N, Dp)
    if n_pad > n:
        x_aug = jnp.pad(x_aug, ((0, n_pad - n), (0, 0)))

    w_parts = [2.0 * centres.T * inv_sigma_sq[None, :],            # (D, M)
               -inv_sigma_sq[None, :],                             # (1, M)
               (-inv_sigma_sq * c2)[None, :]]                      # (1, M)
    if dp > d + 2:
        w_parts.append(jnp.zeros((dp - d - 2, m), f32))
    w_aug = jnp.concatenate(w_parts, axis=0)                       # (Dp, M)
    if mp_pad > m:
        w_aug = jnp.pad(w_aug, ((0, 0), (0, mp_pad - m)))

    if matmul_dtype is not None:
        # Optional bf16 MXU operands: ~3x MXU throughput + half the x/centres
        # DMA bytes, at the cost of distance precision. Off by default.
        x_aug = x_aug.astype(matmul_dtype)
        w_aug = w_aug.astype(matmul_dtype)

    grid = (n_pad // tn, mp_pad // tm)

    out = pl.pallas_call(
        functools.partial(_rbf_kernel, precision=precision),
        out_shape=jax.ShapeDtypeStruct((n_pad, mp_pad), out_dtype),
        grid_spec=pltpu.PrefetchScalarGridSpec(
            num_scalar_prefetch=0,
            grid=grid,
            in_specs=[
                pl.BlockSpec((tn, dp), lambda i, j: (i, 0)),   # X_aug batch tile
                pl.BlockSpec((dp, tm), lambda i, j: (0, j)),   # W_aug feature tile
            ],
            out_specs=pl.BlockSpec((tn, tm), lambda i, j: (i, j)),
        ),
        compiler_params=pltpu.CompilerParams(
            dimension_semantics=("parallel", "parallel"),
            vmem_limit_bytes=int(vmem_limit),
        ),
    )(x_aug, w_aug)

    # Skip the extra HBM pass when no padding was required.
    if n_pad == n and mp_pad == m:
        return out
    return out[:n, :m]


def rbf_reference(x, centres, log_sigmas):
    """Plain-JAX mirror of the PyTorch forward (gaussian basis)."""
    diff = x[:, None, :] - centres[None, :, :]                     # (N, M, D)
    dist = jnp.sqrt(jnp.sum(diff * diff, axis=-1))                 # (N, M)
    scaled = dist / jnp.exp(log_sigmas)[None, :]
    return jnp.exp(-(scaled * scaled))


if __name__ == "__main__":
    key = jax.random.PRNGKey(0)
    k1, k2, k3, k4, k5 = jax.random.split(key, 5)

    # Case 1: toy config (N multiple of 8, M < 128).
    in_features, out_features = 32, 64
    x_a = jax.random.normal(k1, (8, in_features), dtype=jnp.float32)
    centres = jax.random.normal(k2, (out_features, in_features), dtype=jnp.float32)
    log_sigmas = jnp.full((out_features,), 0.1, dtype=jnp.float32)

    out_a = jax.block_until_ready(rbf_forward(x_a, centres, log_sigmas))
    ref_a = rbf_reference(x_a, centres, log_sigmas)
    assert out_a.shape == (8, out_features)
    assert jnp.allclose(out_a, ref_a, atol=1e-4, rtol=1e-4), "mismatch (case 1)"

    # Case 2: N not a multiple of 8 (exercises batch padding + output slice).
    x_b = jax.random.normal(k3, (20, in_features), dtype=jnp.float32)
    out_b = jax.block_until_ready(rbf_forward(x_b, centres, log_sigmas))
    ref_b = rbf_reference(x_b, centres, log_sigmas)
    assert out_b.shape == (20, out_features)
    assert jnp.allclose(out_b, ref_b, atol=1e-4, rtol=1e-4), "mismatch (case 2)"

    # Case 3: inputs near the centres (outputs near 1.0 — stresses the
    # Gram-expansion cancellation; HIGHEST-precision matmul keeps it tight).
    x_c = centres[:8] + 1e-3 * jax.random.normal(k4, (8, in_features), dtype=jnp.float32)
    out_c = jax.block_until_ready(rbf_forward(x_c, centres, log_sigmas))
    ref_c = rbf_reference(x_c, centres, log_sigmas)
    assert jnp.allclose(out_c, ref_c, atol=1e-3, rtol=1e-3), "mismatch (case 3)"

    # Case 4: M > 128 with a forced feature tile (exercises the 2-D grid path).
    centres_d = jax.random.normal(k5, (192, in_features), dtype=jnp.float32)
    log_sigmas_d = jnp.full((192,), -0.2, dtype=jnp.float32)
    out_d = jax.block_until_ready(
        rbf_forward(x_b, centres_d, log_sigmas_d, block_m=128))
    ref_d = rbf_reference(x_b, centres_d, log_sigmas_d)
    assert out_d.shape == (20, 192)
    assert jnp.allclose(out_d, ref_d, atol=1e-4, rtol=1e-4), "mismatch (case 4)"

    print("KERNEL_OK")
</pallas_src>

<mosaic_0001>
module attributes {stable_mosaic.version = 11 : i64} {
  func.func @_rbf_kernel(%arg0: i32, %arg1: i32, %arg2: memref<8x40xf32, #tpu.memory_space<vmem>>, %arg3: memref<40x128xf32, #tpu.memory_space<vmem>>, %arg4: memref<8x128xf32, #tpu.memory_space<vmem>>) attributes {dimension_semantics = [#tpu.dimension_semantics<parallel>, #tpu.dimension_semantics<parallel>], iteration_bounds = array<i64: 1, 1>, scalar_prefetch = 0 : i64, scratch_operands = 0 : i64, tpu.core_type = #tpu.core_type<tc>, window_params = [{transform_indices = @transform_0, window_bounds = array<i64: 8, 40>}, {transform_indices = @transform_1, window_bounds = array<i64: 40, 128>}, {transform_indices = @transform_2, window_bounds = array<i64: 8, 128>}]} {
    %c0 = arith.constant 0 : index
    %c0_0 = arith.constant 0 : index
    %0 = vector.load %arg2[%c0, %c0_0] : memref<8x40xf32, #tpu.memory_space<vmem>>, vector<8x40xf32>
    %c0_1 = arith.constant 0 : index
    %c0_2 = arith.constant 0 : index
    %1 = vector.load %arg3[%c0_1, %c0_2] : memref<40x128xf32, #tpu.memory_space<vmem>>, vector<40x128xf32>
    %cst = arith.constant dense<0.000000e+00> : vector<8x128xf32>
    %2 = tpu.matmul %0, %1, %cst {dimension_numbers = #tpu.dot_dimension_numbers<[1], [0], [0], [1], [0, 0, 1, 1], [], []>, precision = #tpu.contract_precision<fp32>} : vector<8x40xf32>, vector<40x128xf32>, vector<8x128xf32> -> vector<8x128xf32>
    %cst_3 = arith.constant 0.000000e+00 : f32
    %3 = vector.broadcast %cst_3 : f32 to vector<8x128xf32>
    %4 = arith.minimumf %2, %3 : vector<8x128xf32>
    %5 = math.exp %4 : vector<8x128xf32>
    %c0_4 = arith.constant 0 : index
    %c0_5 = arith.constant 0 : index
    %6 = vector.load %arg4[%c0_4, %c0_5] : memref<8x128xf32, #tpu.memory_space<vmem>>, vector<8x128xf32>
    tpu.vector_store %arg4[%c0_4, %c0_5], %5 {strides = array<i32>} : memref<8x128xf32, #tpu.memory_space<vmem>>, vector<8x128xf32>,
    return
  }
  func.func @transform_0(%arg0: i32, %arg1: i32) -> (i32, i32) {
    %c0_i32 = arith.constant 0 : i32
    %c0_i32_0 = arith.constant 0 : i32
    return %arg0, %c0_i32 : i32, i32
  }
  func.func @transform_1(%arg0: i32, %arg1: i32) -> (i32, i32) {
    %c0_i32 = arith.constant 0 : i32
    %c0_i32_0 = arith.constant 0 : i32
    return %c0_i32, %arg1 : i32, i32
  }
  func.func @transform_2(%arg0: i32, %arg1: i32) -> (i32, i32) {
    %c0_i32 = arith.constant 0 : i32
    return %arg0, %arg1 : i32, i32
  }
}

</mosaic_0001>

<llo_original>
// kernel: tpu_custom_call.1
$region0: #{tpu_custom_call.1}
  #allocation0 [shape = 'u32[]', space=smem, size = 0x4, offset = 0x4, fixed_abs, tag = 'smem constant byte address 0x4 - core index']
  #allocation1 [shape = 'u32[144,128]{1,0:T(1,128)}', space=vmem, size = 0x12000, scoped, tag = 'internal scratch']
  %s0 = inlined_call_operand.hbm [shape: f32[8,40], index: 0, kind: input, shape index: {}]
  %s1 = inlined_call_operand.hbm [shape: f32[40,128], index: 1, kind: input, shape index: {}]
  %s2 = inlined_call_operand.hbm [shape: f32[8,128], index: 2, kind: output, shape index: {}]
  %s3 = sld [smem:[#allocation0]]
  $region26: #{tpu_custom_call.1} parent=0
    _
  %s5 = ssub.s32 1, %s3
  %s6 = scalar_select 0, %s5, %s3
  $region1: #{tpu_custom_call.1} parent=0
    #allocation2 [shape = 'u8[4096]{0}', space=vmem, size = 0x1000, scoped, tag = 'input window, operand 0, single buffered']
    #allocation3 [shape = 's32[1]{0}', space=sflag, size = 0x4, scoped, tag = 'scoped memory for tpu_custom_call.1']
    #allocation4 [shape = 's32[1]{0}', space=sflag, size = 0x4, scoped, tag = 'scoped memory for tpu_custom_call.1']
    #allocation5 [shape = 'u8[20480]{0}', space=vmem, size = 0x5000, scoped, tag = 'input window, operand 1, single buffered']
    #allocation6 [shape = 's32[1]{0}', space=sflag, size = 0x4, scoped, tag = 'scoped memory for tpu_custom_call.1']
    #allocation7 [shape = 'u8[4096]{0}', space=vmem, size = 0x1000, scoped, tag = 'output window, operand 0, single buffered']
    %7 = vsyncpa [#allocation3], 0
    %8 = vsyncpa [#allocation6], 0
    %9 = vsyncpa [#allocation4], 0
    // Predicated region
    $region2: #{tpu_custom_call.1} parent=1 // pred_check
      _
    $region3: #{tpu_custom_call.1} parent=1 // pred_check_branch
      %11 = sbr.rel (0) target = $region5
    $region4: #{tpu_custom_call.1} parent=1 // pred_region
      %s13 = ssub.s32 128, 128
      %14 = vsyncadd [#allocation3], %s13
      %s16 = sshll.u32 [#allocation2], 4
      %s17 = int_to_ptr.vmem [resolvable:$true] %s16
      %19 = dma.hbm_to_vmem [thread:$0]  %s0, 128, %s17, [#allocation3]
    $region5: #{tpu_custom_call.1} parent=1 // pred_fallthru
      _
    // Predicated region
    $region6: #{tpu_custom_call.1} parent=1 // pred_check
      _
    $region7: #{tpu_custom_call.1} parent=1 // pred_check_branch
      %21 = sbr.rel (0) target = $region9
    $region8: #{tpu_custom_call.1} parent=1 // pred_region
      %s23 = ssub.s32 640, 640
      %24 = vsyncadd [#allocation6], %s23
      %s25 = sshll.u32 [#allocation5], 4
      %s26 = int_to_ptr.vmem [resolvable:$true] %s25
      %31 = dma.hbm_to_vmem [thread:$0]  %s1, 640, %s26, [#allocation6], 128, 128, 8
    $region9: #{tpu_custom_call.1} parent=1 // pred_fallthru
      _
    // Predicated region
    $region10: #{tpu_custom_call.1} parent=1 // pred_check
      _
    $region11: #{tpu_custom_call.1} parent=1 // pred_check_branch
      %33 = sbr.rel (0) target = $region13
    $region12: #{tpu_custom_call.1} parent=1 // pred_region
      %34 = dma.done [#allocation3], 128
    $region13: #{tpu_custom_call.1} parent=1 // pred_fallthru
      _
    // Predicated region
    $region14: #{tpu_custom_call.1} parent=1 // pred_check
      _
    $region15: #{tpu_custom_call.1} parent=1 // pred_check_branch
      %36 = sbr.rel (0) target = $region17
    $region16: #{tpu_custom_call.1} parent=1 // pred_region
      %37 = dma.done [#allocation6], 640
    $region17: #{tpu_custom_call.1} parent=1 // pred_fallthru
      _
    %v38 = vld [vmem:[#allocation2] sm:$0xff]
    %v39 = vld [vmem:[#allocation5] sm:$0xff]
    %v40 = vld [vmem:[#allocation5 + $0x8] sm:$0xff]
    %v41 = vld [vmem:[#allocation5 + $0x10] sm:$0xff]
    %v42 = vld [vmem:[#allocation5 + $0x18] sm:$0xff]
    %v43 = vld [vmem:[#allocation5 + $0x20] sm:$0xff]
    %vm44 = vcmask 326656
    %v46 = vsel %vm44, %v38, 0
    %48 = vmatprep.subr.mxu0 0.0
    %v49 = vand.u32 %v39, 4294901760
    %50 = vmatpush1.msra.mxu0 %v49
    %51 = vmatprep.subr.mxu0 0.0
    %v52 = vand.u32 %v40, 4294901760
    %53 = vmatpush1.msra.mxu0 %v52
    %54 = vmatprep.subr.mxu0 0.0
    %v55 = vand.u32 %v41, 4294901760
    %56 = vmatpush1.msra.mxu0 %v55
    %57 = vmatprep.subr.mxu0 0.0
    %v58 = vand.u32 %v42, 4294901760
    %59 = vmatpush1.msra.mxu0 %v58
    %60 = vmatprep.subr.mxu0 0.0
    %v61 = vand.u32 %v43, 4294901760
    %62 = vmatpush1.msra.mxu0 %v61
    %63 = vmatprep.subr.mxu0 0.0
    %64 = vmatpush1.msra.mxu0 0.0
    %65 = vmatprep.subr.mxu0 0.0
    %66 = vmatpush1.msra.mxu0 0.0
    %67 = vmatprep.subr.mxu0 0.0
    %68 = vmatpush1.msra.mxu0 0.0
    %69 = vmatprep.subr.mxu0 0.0
    %70 = vmatpush1.msra.mxu0 0.0
    %71 = vmatprep.subr.mxu0 0.0
    %72 = vmatpush1.msra.mxu0 0.0
    %73 = vmatprep.subr.mxu0 0.0
    %74 = vmatpush1.msra.mxu0 0.0
    %75 = vmatprep.subr.mxu0 0.0
    %76 = vmatpush1.msra.mxu0 0.0
    %77 = vmatprep.subr.mxu0 0.0
    %78 = vmatpush1.msra.mxu0 0.0
    %79 = vmatprep.subr.mxu0 0.0
    %80 = vmatpush1.msra.mxu0 0.0
    %81 = vmatprep.subr.mxu0 0.0
    %82 = vmatpush1.msra.mxu0 0.0
    %83 = vmatprep.subr.mxu0 0.0
    %84 = vmatpush1.msra.mxu0 0.0
    %85 = vmatprep.subr.mxu0 0.0
    %86 = vmatpush1.msra.mxu0 0.0
    %87 = vmatprep.subr.mxu0 0.0
    %88 = vmatpush1.msra.mxu0 0.0
    %89 = vmatprep.subr.mxu0 0.0
    %90 = vmatpush1.msra.mxu0 0.0
    %91 = vmatprep.subr.mxu0 0.0
    %92 = vmatpush1.msra.mxu0 0.0
    %93 = vmatprep.subr.mxu0 0.0
    %94 = vmatpush1.msra.mxu0 0.0
    %95 = vmatprep.subr.mxu0 0.0
    %96 = vmatpush1.msra.mxu0 0.0
    %97 = vmatprep.subr.mxu0 0.0
    %98 = vmatpush1.msra.mxu0 0.0
    %99 = vmatprep.subr.mxu0 0.0
    %100 = vmatpush1.msra.mxu0 0.0
    %101 = vmatprep.subr.mxu0 0.0
    %102 = vmatpush1.msra.mxu0 0.0
    %103 = vmatprep.subr.mxu0 0.0
    %104 = vmatpush1.msra.mxu0 0.0
    %105 = vmatprep.subr.mxu0 0.0
    %106 = vmatpush1.msra.mxu0 0.0
    %107 = vmatprep.subr.mxu0 0.0
    %108 = vmatpush1.msra.mxu0 0.0
    %109 = vmatprep.subr.mxu0 0.0
    %110 = vmatpush1.msra.mxu0 0.0
    %111 = vmatprep.subr.mxu0 0.0
    %112 = vmatpush1.msra.mxu0 0.0
    %113 = vmatprep.subr.mxu0 0.0
    %114 = vmatpush1.msra.mxu0 0.0
    %115 = vmatprep.subr.mxu0 0.0
    %116 = vmatpush1.msra.mxu0 0.0
    %117 = vmatprep.mubr.f32.mxu0 0.0
    %v118 = vand.u32 %v46, 4294901760
    %v119 = vsub.f32 %v46, %v118
    %v120 = vand.u32 %v119, 4294901760
    %v121 = vsub.f32 %v119, %v120
    %v122 = vand.u32 %v121, 4294901760
    %123 = vmatmul.mubr.f32.gmra.mrb[0].mxu0 %v122
    %v124 = vpop.f32.mrb[0].mxu0
    %v125 = vadd.f32 0.0, %v124
    %v126 = vpop.f32.mrb[0].mxu0
    %127 = vdwg.mxu0
    %128 = vmatprep.subr.mxu0 0.0
    %v129 = vand.u32 %v39, 4294901760
    %v130 = vsub.f32 %v39, %v129
    %v131 = vand.u32 %v130, 4294901760
    %v132 = vsub.f32 %v130, %v131
    %v133 = vand.u32 %v132, 4294901760
    %134 = vmatpush1.msra.mxu0 %v133
    %135 = vmatprep.subr.mxu0 0.0
    %v136 = vand.u32 %v40, 4294901760
    %v137 = vsub.f32 %v40, %v136
    %v138 = vand.u32 %v137, 4294901760
    %v139 = vsub.f32 %v137, %v138
    %v140 = vand.u32 %v139, 4294901760
    %141 = vmatpush1.msra.mxu0 %v140
    %142 = vmatprep.subr.mxu0 0.0
    %v143 = vand.u32 %v41, 4294901760
    %v144 = vsub.f32 %v41, %v143
    %v145 = vand.u32 %v144, 4294901760
    %v146 = vsub.f32 %v144, %v145
    %v147 = vand.u32 %v146, 4294901760
    %148 = vmatpush1.msra.mxu0 %v147
    %149 = vmatprep.subr.mxu0 0.0
    %v150 = vand.u32 %v42, 4294901760
    %v151 = vsub.f32 %v42, %v150
    %v152 = vand.u32 %v151, 4294901760
    %v153 = vsub.f32 %v151, %v152
    %v154 = vand.u32 %v153, 4294901760
    %155 = vmatpush1.msra.mxu0 %v154
    %156 = vmatprep.subr.mxu0 0.0
    %v157 = vand.u32 %v43, 4294901760
    %v158 = vsub.f32 %v43, %v157
    %v159 = vand.u32 %v158, 4294901760
    %v160 = vsub.f32 %v158, %v159
    %v161 = vand.u32 %v160, 4294901760
    %162 = vmatpush1.msra.mxu0 %v161
    %163 = vmatprep.subr.mxu0 0.0
    %164 = vmatpush1.msra.mxu0 0.0
    %165 = vmatprep.subr.mxu0 0.0
    %166 = vmatpush1.msra.mxu0 0.0
    %167 = vmatprep.subr.mxu0 0.0
    %168 = vmatpush1.msra.mxu0 0.0
    %169 = vmatprep.subr.mxu0 0.0
    %170 = vmatpush1.msra.mxu0 0.0
    %171 = vmatprep.subr.mxu0 0.0
    %172 = vmatpush1.msra.mxu0 0.0
    %173 = vmatprep.subr.mxu0 0.0
    %174 = vmatpush1.msra.mxu0 0.0
    %175 = vmatprep.subr.mxu0 0.0
    %176 = vmatpush1.msra.mxu0 0.0
    %177 = vmatprep.subr.mxu0 0.0
    %178 = vmatpush1.msra.mxu0 0.0
    %179 = vmatprep.subr.mxu0 0.0
    %180 = vmatpush1.msra.mxu0 0.0
    %181 = vmatprep.subr.mxu0 0.0
    %182 = vmatpush1.msra.mxu0 0.0
    %183 = vmatprep.subr.mxu0 0.0
    %184 = vmatpush1.msra.mxu0 0.0
    %185 = vmatprep.subr.mxu0 0.0
    %186 = vmatpush1.msra.mxu0 0.0
    %187 = vmatprep.subr.mxu0 0.0
    %188 = vmatpush1.msra.mxu0 0.0
    %189 = vmatprep.subr.mxu0 0.0
    %190 = vmatpush1.msra.mxu0 0.0
    %191 = vmatprep.subr.mxu0 0.0
    %192 = vmatpush1.msra.mxu0 0.0
    %193 = vmatprep.subr.mxu0 0.0
    %194 = vmatpush1.msra.mxu0 0.0
    %195 = vmatprep.subr.mxu0 0.0
    %196 = vmatpush1.msra.mxu0 0.0
    %197 = vmatprep.subr.mxu0 0.0
    %198 = vmatpush1.msra.mxu0 0.0
    %199 = vmatprep.subr.mxu0 0.0
    %200 = vmatpush1.msra.mxu0 0.0
    %201 = vmatprep.subr.mxu0 0.0
    %202 = vmatpush1.msra.mxu0 0.0
    %203 = vmatprep.subr.mxu0 0.0
    %204 = vmatpush1.msra.mxu0 0.0
    %205 = vmatprep.subr.mxu0 0.0
    %206 = vmatpush1.msra.mxu0 0.0
    %207 = vmatprep.subr.mxu0 0.0
    %208 = vmatpush1.msra.mxu0 0.0
    %209 = vmatprep.subr.mxu0 0.0
    %210 = vmatpush1.msra.mxu0 0.0
    %211 = vmatprep.subr.mxu0 0.0
    %212 = vmatpush1.msra.mxu0 0.0
    %213 = vmatprep.subr.mxu0 0.0
    %214 = vmatpush1.msra.mxu0 0.0
    %215 = vmatprep.subr.mxu0 0.0
    %216 = vmatpush1.msra.mxu0 0.0
    %217 = vmatprep.mubr.f32.mxu0 0.0
    %v218 = vand.u32 %v46, 4294901760
    %219 = vmatmul.mubr.f32.gmra.mrb[0].mxu0 %v218
    %v220 = vpop.f32.mrb[0].mxu0
    %v221 = vadd.f32 %v125, %v220
    %v222 = vpop.f32.mrb[0].mxu0
    %223 = vdwg.mxu0
    %224 = vmatprep.subr.mxu0 0.0
    %v225 = vand.u32 %v39, 4294901760
    %v226 = vsub.f32 %v39, %v225
    %227 = vmatpush1.msra.mxu0 %v226
    %228 = vmatprep.subr.mxu0 0.0
    %v229 = vand.u32 %v40, 4294901760
    %v230 = vsub.f32 %v40, %v229
    %231 = vmatpush1.msra.mxu0 %v230
    %232 = vmatprep.subr.mxu0 0.0
    %v233 = vand.u32 %v41, 4294901760
    %v234 = vsub.f32 %v41, %v233
    %235 = vmatpush1.msra.mxu0 %v234
    %236 = vmatprep.subr.mxu0 0.0
    %v237 = vand.u32 %v42, 4294901760
    %v238 = vsub.f32 %v42, %v237
    %239 = vmatpush1.msra.mxu0 %v238
    %240 = vmatprep.subr.mxu0 0.0
    %v241 = vand.u32 %v43, 4294901760
    %v242 = vsub.f32 %v43, %v241
    %243 = vmatpush1.msra.mxu0 %v242
    %244 = vmatprep.subr.mxu0 0.0
    %245 = vmatpush1.msra.mxu0 0.0
    %246 = vmatprep.subr.mxu0 0.0
    %247 = vmatpush1.msra.mxu0 0.0
    %248 = vmatprep.subr.mxu0 0.0
    %249 = vmatpush1.msra.mxu0 0.0
    %250 = vmatprep.subr.mxu0 0.0
    %251 = vmatpush1.msra.mxu0 0.0
    %252 = vmatprep.subr.mxu0 0.0
    %253 = vmatpush1.msra.mxu0 0.0
    %254 = vmatprep.subr.mxu0 0.0
    %255 = vmatpush1.msra.mxu0 0.0
    %256 = vmatprep.subr.mxu0 0.0
    %257 = vmatpush1.msra.mxu0 0.0
    %258 = vmatprep.subr.mxu0 0.0
    %259 = vmatpush1.msra.mxu0 0.0
    %260 = vmatprep.subr.mxu0 0.0
    %261 = vmatpush1.msra.mxu0 0.0
    %262 = vmatprep.subr.mxu0 0.0
    %263 = vmatpush1.msra.mxu0 0.0
    %264 = vmatprep.subr.mxu0 0.0
    %265 = vmatpush1.msra.mxu0 0.0
    %266 = vmatprep.subr.mxu0 0.0
    %267 = vmatpush1.msra.mxu0 0.0
    %268 = vmatprep.subr.mxu0 0.0
    %269 = vmatpush1.msra.mxu0 0.0
    %270 = vmatprep.subr.mxu0 0.0
    %271 = vmatpush1.msra.mxu0 0.0
    %272 = vmatprep.subr.mxu0 0.0
    %273 = vmatpush1.msra.mxu0 0.0
    %274 = vmatprep.subr.mxu0 0.0
    %275 = vmatpush1.msra.mxu0 0.0
    %276 = vmatprep.subr.mxu0 0.0
    %277 = vmatpush1.msra.mxu0 0.0
    %278 = vmatprep.subr.mxu0 0.0
    %279 = vmatpush1.msra.mxu0 0.0
    %280 = vmatprep.subr.mxu0 0.0
    %281 = vmatpush1.msra.mxu0 0.0
    %282 = vmatprep.subr.mxu0 0.0
    %283 = vmatpush1.msra.mxu0 0.0
    %284 = vmatprep.subr.mxu0 0.0
    %285 = vmatpush1.msra.mxu0 0.0
    %286 = vmatprep.subr.mxu0 0.0
    %287 = vmatpush1.msra.mxu0 0.0
    %288 = vmatprep.subr.mxu0 0.0
    %289 = vmatpush1.msra.mxu0 0.0
    %290 = vmatprep.subr.mxu0 0.0
    %291 = vmatpush1.msra.mxu0 0.0
    %292 = vmatprep.subr.mxu0 0.0
    %293 = vmatpush1.msra.mxu0 0.0
    %294 = vmatprep.subr.mxu0 0.0
    %295 = vmatpush1.msra.mxu0 0.0
    %296 = vmatprep.subr.mxu0 0.0
    %297 = vmatpush1.msra.mxu0 0.0
    %298 = vmatprep.mubr.f32.mxu0 0.0
    %v299 = vand.u32 %v46, 4294901760
    %v300 = vsub.f32 %v46, %v299
    %301 = vmatmul.mubr.f32.gmra.mrb[0].mxu0 %v300
    %v302 = vpop.f32.mrb[0].mxu0
    %v303 = vadd.f32 %v221, %v302
    %v304 = vpop.f32.mrb[0].mxu0
    %305 = vdwg.mxu0
    %306 = vmatprep.subr.mxu0 0.0
    %v307 = vand.u32 %v39, 4294901760
    %308 = vmatpush1.msra.mxu0 %v307
    %309 = vmatprep.subr.mxu0 0.0
    %v310 = vand.u32 %v40, 4294901760
    %311 = vmatpush1.msra.mxu0 %v310
    %312 = vmatprep.subr.mxu0 0.0
    %v313 = vand.u32 %v41, 4294901760
    %314 = vmatpush1.msra.mxu0 %v313
    %315 = vmatprep.subr.mxu0 0.0
    %v316 = vand.u32 %v42, 4294901760
    %317 = vmatpush1.msra.mxu0 %v316
    %318 = vmatprep.subr.mxu0 0.0
    %v319 = vand.u32 %v43, 4294901760
    %320 = vmatpush1.msra.mxu0 %v319
    %321 = vmatprep.subr.mxu0 0.0
    %322 = vmatpush1.msra.mxu0 0.0
    %323 = vmatprep.subr.mxu0 0.0
    %324 = vmatpush1.msra.mxu0 0.0
    %325 = vmatprep.subr.mxu0 0.0
    %326 = vmatpush1.msra.mxu0 0.0
    %327 = vmatprep.subr.mxu0 0.0
    %328 = vmatpush1.msra.mxu0 0.0
    %329 = vmatprep.subr.mxu0 0.0
    %330 = vmatpush1.msra.mxu0 0.0
    %331 = vmatprep.subr.mxu0 0.0
    %332 = vmatpush1.msra.mxu0 0.0
    %333 = vmatprep.subr.mxu0 0.0
    %334 = vmatpush1.msra.mxu0 0.0
    %335 = vmatprep.subr.mxu0 0.0
    %336 = vmatpush1.msra.mxu0 0.0
    %337 = vmatprep.subr.mxu0 0.0
    %338 = vmatpush1.msra.mxu0 0.0
    %339 = vmatprep.subr.mxu0 0.0
    %340 = vmatpush1.msra.mxu0 0.0
    %341 = vmatprep.subr.mxu0 0.0
    %342 = vmatpush1.msra.mxu0 0.0
    %343 = vmatprep.subr.mxu0 0.0
    %344 = vmatpush1.msra.mxu0 0.0
    %345 = vmatprep.subr.mxu0 0.0
    %346 = vmatpush1.msra.mxu0 0.0
    %347 = vmatprep.subr.mxu0 0.0
    %348 = vmatpush1.msra.mxu0 0.0
    %349 = vmatprep.subr.mxu0 0.0
    %350 = vmatpush1.msra.mxu0 0.0
    %351 = vmatprep.subr.mxu0 0.0
    %352 = vmatpush1.msra.mxu0 0.0
    %353 = vmatprep.subr.mxu0 0.0
    %354 = vmatpush1.msra.mxu0 0.0
    %355 = vmatprep.subr.mxu0 0.0
    %356 = vmatpush1.msra.mxu0 0.0
    %357 = vmatprep.subr.mxu0 0.0
    %358 = vmatpush1.msra.mxu0 0.0
    %359 = vmatprep.subr.mxu0 0.0
    %360 = vmatpush1.msra.mxu0 0.0
    %361 = vmatprep.subr.mxu0 0.0
    %362 = vmatpush1.msra.mxu0 0.0
    %363 = vmatprep.subr.mxu0 0.0
    %364 = vmatpush1.msra.mxu0 0.0
    %365 = vmatprep.subr.mxu0 0.0
    %366 = vmatpush1.msra.mxu0 0.0
    %367 = vmatprep.subr.mxu0 0.0
    %368 = vmatpush1.msra.mxu0 0.0
    %369 = vmatprep.subr.mxu0 0.0
    %370 = vmatpush1.msra.mxu0 0.0
    %371 = vmatprep.subr.mxu0 0.0
    %372 = vmatpush1.msra.mxu0 0.0
    %373 = vmatprep.subr.mxu0 0.0
    %374 = vmatpush1.msra.mxu0 0.0
    %375 = vmatprep.mubr.f32.mxu0 0.0
    %v376 = vand.u32 %v46, 4294901760
    %v377 = vsub.f32 %v46, %v376
    %v378 = vand.u32 %v377, 4294901760
    %379 = vmatmul.mubr.f32.gmra.mrb[0].mxu0 %v378
    %v380 = vpop.f32.mrb[0].mxu0
    %v381 = vadd.f32 %v303, %v380
    %v382 = vpop.f32.mrb[0].mxu0
    %383 = vdwg.mxu0
    %384 = vmatprep.subr.mxu0 0.0
    %v385 = vand.u32 %v39, 4294901760
    %v386 = vsub.f32 %v39, %v385
    %v387 = vand.u32 %v386, 4294901760
    %388 = vmatpush1.msra.mxu0 %v387
    %389 = vmatprep.subr.mxu0 0.0
    %v390 = vand.u32 %v40, 4294901760
    %v391 = vsub.f32 %v40, %v390
    %v392 = vand.u32 %v391, 4294901760
    %393 = vmatpush1.msra.mxu0 %v392
    %394 = vmatprep.subr.mxu0 0.0
    %v395 = vand.u32 %v41, 4294901760
    %v396 = vsub.f32 %v41, %v395
    %v397 = vand.u32 %v396, 4294901760
    %398 = vmatpush1.msra.mxu0 %v397
    %399 = vmatprep.subr.mxu0 0.0
    %v400 = vand.u32 %v42, 4294901760
    %v401 = vsub.f32 %v42, %v400
    %v402 = vand.u32 %v401, 4294901760
    %403 = vmatpush1.msra.mxu0 %v402
    %404 = vmatprep.subr.mxu0 0.0
    %v405 = vand.u32 %v43, 4294901760
    %v406 = vsub.f32 %v43, %v405
    %v407 = vand.u32 %v406, 4294901760
    %408 = vmatpush1.msra.mxu0 %v407
    %409 = vmatprep.subr.mxu0 0.0
    %410 = vmatpush1.msra.mxu0 0.0
    %411 = vmatprep.subr.mxu0 0.0
    %412 = vmatpush1.msra.mxu0 0.0
    %413 = vmatprep.subr.mxu0 0.0
    %414 = vmatpush1.msra.mxu0 0.0
    %415 = vmatprep.subr.mxu0 0.0
    %416 = vmatpush1.msra.mxu0 0.0
    %417 = vmatprep.subr.mxu0 0.0
    %418 = vmatpush1.msra.mxu0 0.0
    %419 = vmatprep.subr.mxu0 0.0
    %420 = vmatpush1.msra.mxu0 0.0
    %421 = vmatprep.subr.mxu0 0.0
    %422 = vmatpush1.msra.mxu0 0.0
    %423 = vmatprep.subr.mxu0 0.0
    %424 = vmatpush1.msra.mxu0 0.0
    %425 = vmatprep.subr.mxu0 0.0
    %426 = vmatpush1.msra.mxu0 0.0
    %427 = vmatprep.subr.mxu0 0.0
    %428 = vmatpush1.msra.mxu0 0.0
    %429 = vmatprep.subr.mxu0 0.0
    %430 = vmatpush1.msra.mxu0 0.0
    %431 = vmatprep.subr.mxu0 0.0
    %432 = vmatpush1.msra.mxu0 0.0
    %433 = vmatprep.subr.mxu0 0.0
    %434 = vmatpush1.msra.mxu0 0.0
    %435 = vmatprep.subr.mxu0 0.0
    %436 = vmatpush1.msra.mxu0 0.0
    %437 = vmatprep.subr.mxu0 0.0
    %438 = vmatpush1.msra.mxu0 0.0
    %439 = vmatprep.subr.mxu0 0.0
    %440 = vmatpush1.msra.mxu0 0.0
    %441 = vmatprep.subr.mxu0 0.0
    %442 = vmatpush1.msra.mxu0 0.0
    %443 = vmatprep.subr.mxu0 0.0
    %444 = vmatpush1.msra.mxu0 0.0
    %445 = vmatprep.subr.mxu0 0.0
    %446 = vmatpush1.msra.mxu0 0.0
    %447 = vmatprep.subr.mxu0 0.0
    %448 = vmatpush1.msra.mxu0 0.0
    %449 = vmatprep.subr.mxu0 0.0
    %450 = vmatpush1.msra.mxu0 0.0
    %451 = vmatprep.subr.mxu0 0.0
    %452 = vmatpush1.msra.mxu0 0.0
    %453 = vmatprep.subr.mxu0 0.0
    %454 = vmatpush1.msra.mxu0 0.0
    %455 = vmatprep.subr.mxu0 0.0
    %456 = vmatpush1.msra.mxu0 0.0
    %457 = vmatprep.subr.mxu0 0.0
    %458 = vmatpush1.msra.mxu0 0.0
    %459 = vmatprep.subr.mxu0 0.0
    %460 = vmatpush1.msra.mxu0 0.0
    %461 = vmatprep.subr.mxu0 0.0
    %462 = vmatpush1.msra.mxu0 0.0
    %463 = vmatprep.mubr.f32.mxu0 0.0
    %v464 = vand.u32 %v46, 4294901760
    %465 = vmatmul.mubr.f32.gmra.mrb[0].mxu0 %v464
    %v466 = vpop.f32.mrb[0].mxu0
    %v467 = vadd.f32 %v381, %v466
    %v468 = vpop.f32.mrb[0].mxu0
    %469 = vdwg.mxu0
    %470 = vmatprep.subr.mxu0 0.0
    %v471 = vand.u32 %v39, 4294901760
    %472 = vmatpush1.msra.mxu0 %v471
    %473 = vmatprep.subr.mxu0 0.0
    %v474 = vand.u32 %v40, 4294901760
    %475 = vmatpush1.msra.mxu0 %v474
    %476 = vmatprep.subr.mxu0 0.0
    %v477 = vand.u32 %v41, 4294901760
    %478 = vmatpush1.msra.mxu0 %v477
    %479 = vmatprep.subr.mxu0 0.0
    %v480 = vand.u32 %v42, 4294901760
    %481 = vmatpush1.msra.mxu0 %v480
    %482 = vmatprep.subr.mxu0 0.0
    %v483 = vand.u32 %v43, 4294901760
    %484 = vmatpush1.msra.mxu0 %v483
    %485 = vmatprep.subr.mxu0 0.0
    %486 = vmatpush1.msra.mxu0 0.0
    %487 = vmatprep.subr.mxu0 0.0
    %488 = vmatpush1.msra.mxu0 0.0
    %489 = vmatprep.subr.mxu0 0.0
    %490 = vmatpush1.msra.mxu0 0.0
    %491 = vmatprep.subr.mxu0 0.0
    %492 = vmatpush1.msra.mxu0 0.0
    %493 = vmatprep.subr.mxu0 0.0
    %494 = vmatpush1.msra.mxu0 0.0
    %495 = vmatprep.subr.mxu0 0.0
    %496 = vmatpush1.msra.mxu0 0.0
    %497 = vmatprep.subr.mxu0 0.0
    %498 = vmatpush1.msra.mxu0 0.0
    %499 = vmatprep.subr.mxu0 0.0
    %500 = vmatpush1.msra.mxu0 0.0
    %501 = vmatprep.subr.mxu0 0.0
    %502 = vmatpush1.msra.mxu0 0.0
    %503 = vmatprep.subr.mxu0 0.0
    %504 = vmatpush1.msra.mxu0 0.0
    %505 = vmatprep.subr.mxu0 0.0
    %506 = vmatpush1.msra.mxu0 0.0
    %507 = vmatprep.subr.mxu0 0.0
    %508 = vmatpush1.msra.mxu0 0.0
    %509 = vmatprep.subr.mxu0 0.0
    %510 = vmatpush1.msra.mxu0 0.0
    %511 = vmatprep.subr.mxu0 0.0
    %512 = vmatpush1.msra.mxu0 0.0
    %513 = vmatprep.subr.mxu0 0.0
    %514 = vmatpush1.msra.mxu0 0.0
    %515 = vmatprep.subr.mxu0 0.0
    %516 = vmatpush1.msra.mxu0 0.0
    %517 = vmatprep.subr.mxu0 0.0
    %518 = vmatpush1.msra.mxu0 0.0
    %519 = vmatprep.subr.mxu0 0.0
    %520 = vmatpush1.msra.mxu0 0.0
    %521 = vmatprep.subr.mxu0 0.0
    %522 = vmatpush1.msra.mxu0 0.0
    %523 = vmatprep.subr.mxu0 0.0
    %524 = vmatpush1.msra.mxu0 0.0
    %525 = vmatprep.subr.mxu0 0.0
    %526 = vmatpush1.msra.mxu0 0.0
    %527 = vmatprep.subr.mxu0 0.0
    %528 = vmatpush1.msra.mxu0 0.0
    %529 = vmatprep.subr.mxu0 0.0
    %530 = vmatpush1.msra.mxu0 0.0
    %531 = vmatprep.subr.mxu0 0.0
    %532 = vmatpush1.msra.mxu0 0.0
    %533 = vmatprep.subr.mxu0 0.0
    %534 = vmatpush1.msra.mxu0 0.0
    %535 = vmatprep.subr.mxu0 0.0
    %536 = vmatpush1.msra.mxu0 0.0
    %537 = vmatprep.subr.mxu0 0.0
    %538 = vmatpush1.msra.mxu0 0.0
    %539 = vmatprep.mubr.f32.mxu0 0.0
    %v540 = vand.u32 %v46, 4294901760
    %541 = vmatmul.mubr.f32.gmra.mrb[0].mxu0 %v540
    %v542 = vpop.f32.mrb[0].mxu0
    %v543 = vadd.f32 %v467, %v542
    %v544 = vpop.f32.mrb[0].mxu0
    %545 = vdwg.mxu0
    %v546 = vmin.f32 %v543, 0.0
    %v547 = vmul.f32 %v546, 1.442695
    %v548 = vpow.pop %v547
    %549 = vst [vmem:[#allocation7] sm:$0xff] %v548
    // Predicated region
    $region18: #{tpu_custom_call.1} parent=1 // pred_check
      _
    $region19: #{tpu_custom_call.1} parent=1 // pred_check_branch
      %551 = sbr.rel (0) target = $region21
    $region20: #{tpu_custom_call.1} parent=1 // pred_region
      %s553 = ssub.s32 128, 128
      %554 = vsyncadd [#allocation4], %s553
      %s556 = sshll.u32 [#allocation7], 4
      %s557 = int_to_ptr.vmem [resolvable:$true] %s556
      %559 = dma.vmem_to_hbm [thread:$0]  %s557, 128, %s2, [#allocation4]
    $region21: #{tpu_custom_call.1} parent=1 // pred_fallthru
      _
    // Predicated region
    $region22: #{tpu_custom_call.1} parent=1 // pred_check
      _
    $region23: #{tpu_custom_call.1} parent=1 // pred_check_branch
      %561 = sbr.rel (0) target = $region25
    $region24: #{tpu_custom_call.1} parent=1 // pred_region
      %562 = dma.done [#allocation4], 128
    $region25: #{tpu_custom_call.1} parent=1 // pred_fallthru
      _
    %563 = vsyncpa [#allocation3], 1
    %564 = vsyncpa [#allocation6], 1
    %565 = vsyncpa [#allocation4], 1

</llo_original>
